<compile_context>
chip_gen: v5e
topology: v5e:2x2
jax: 0.10.0
libtpu: 0.0.40
codegen_flags: <defaults>
</compile_context>

<pallas_src>
import functools
import math

import jax
import jax.numpy as jnp
from jax.experimental import pallas as pl
from jax.experimental.pallas import tpu as pltpu


def _device_kind():
    try:
        return jax.devices()[0].device_kind.lower()
    except Exception:
        return ""


def _arcface_kernel(emb_ref, w_ref, inv_ref, lab_ref, out_ref, *,
                    s, cos_m, sin_m, threshold, mm, tn):
    # grid = (class_tiles, row_tiles); row axis is innermost (fastest).
    j = pl.program_id(0)                 # class-tile index

    emb = emb_ref[...]                   # [tm, E]   compute dtype (bf16/f32)
    w = w_ref[...]                       # [E, tn]   compute dtype
    inv = inv_ref[...]                   # [1, tn]   f32 precomputed 1/||w_col||
    lab = lab_ref[...]                   # [tm, 1]   int32

    # MXU matmul (bf16 operands, f32 accumulation).
    raw = jnp.dot(emb, w, preferred_element_type=jnp.float32)    # [tm, tn]

    # Unit-scale clipped cosine (single full-width multiply + clip).
    cos_t = jnp.clip(raw * inv, -1.0, 1.0)                       # [tm, tn]

    # Label mask for this class tile; margin math only on the [tm, 1] target.
    tm = raw.shape[0]
    col_ids = j * tn + jax.lax.broadcasted_iota(jnp.int32, (tm, tn), 1)
    label_mask = col_ids == lab                                  # [tm, tn]

    tgt_cos = jnp.sum(jnp.where(label_mask, cos_t, 0.0),
                      axis=1, keepdims=True)                     # [tm, 1]
    sin_t = jnp.sqrt(jnp.maximum(1.0 - tgt_cos * tgt_cos, 0.0))
    cos_t_m = tgt_cos * cos_m - sin_t * sin_m
    cos_t_m = jnp.where(tgt_cos <= threshold, tgt_cos - mm, cos_t_m)

    out_ref[...] = (jnp.where(label_mask, cos_t_m, cos_t) * s).astype(out_ref.dtype)


def arcface_forward(embeddings, weight, label, *, s=64.0, m=0.5,
                    compute_dtype=jnp.bfloat16, out_dtype=jnp.float32,
                    target_tile_bytes=2 << 20):
    """embeddings: [B, E] f32, weight: [E, C] f32, label: [B] int -> [B, C]."""
    B, E = embeddings.shape
    E2, C = weight.shape
    assert E == E2

    kind = _device_kind()
    is_v7 = ("v7" in kind) or ("tpu7" in kind)
    is_v5 = "v5" in kind

    itemsize = jnp.dtype(compute_dtype).itemsize
    out_isize = jnp.dtype(out_dtype).itemsize

    # --- Pad the contraction dim to a lane-friendly multiple of 128. ---
    E_pad = max(128, pl.cdiv(E, 128) * 128)

    # --- Row tile: keep everything resident for small B, tile at 128/256. ---
    tm_cap = 128 if is_v5 else 256
    tm = B if B <= tm_cap else tm_cap
    B_pad = pl.cdiv(B, tm) * tm

    # --- Class tile sized by streamed-weight bytes (~target_tile_bytes). ---
    c128 = pl.cdiv(C, 128) * 128
    tn = int(target_tile_bytes) // (E_pad * itemsize)
    tn = max(128, (tn // 128) * 128)
    tn = min(tn, c128)
    if is_v7:
        # Only v7x has 2 TensorCores; make sure megacore has >= 2 parallel
        # steps. On single-TC v5e/v6e the grid is serial, keep tiles big.
        while tn > 128 and (pl.cdiv(c128, tn) * (B_pad // tm)) < 2:
            tn = max(128, ((tn // 2) // 128) * 128)
    C_pad = pl.cdiv(C, tn) * tn

    # --- Precompute per-column 1/||w_col|| in f32 (hoisted out of kernel). ---
    w_f32 = weight.astype(jnp.float32)
    sumsq = jnp.sum(w_f32 * w_f32, axis=0, keepdims=True)            # [1, C]
    inv_col = jnp.where(sumsq > 0.0, jax.lax.rsqrt(sumsq), 0.0)      # [1, C]

    # --- Cast / pad operands. Zero padding is exact for dot and norms. ---
    emb = embeddings.astype(compute_dtype)
    if E_pad != E or B_pad != B:
        emb = jnp.pad(emb, ((0, B_pad - B), (0, E_pad - E)))

    w = weight.astype(compute_dtype)
    if E_pad != E or C_pad != C:
        w = jnp.pad(w, ((0, E_pad - E), (0, C_pad - C)))
    if C_pad != C:
        inv_col = jnp.pad(inv_col, ((0, 0), (0, C_pad - C)))

    lab = label.astype(jnp.int32)
    lab = jnp.where(lab < 0, lab + C, lab)     # PyTorch-style negative wrap
    lab2d = lab.reshape(B, 1)
    if B_pad != B:
        lab2d = jnp.pad(lab2d, ((0, B_pad - B), (0, 0)))

    kernel = functools.partial(
        _arcface_kernel,
        s=float(s),
        cos_m=float(math.cos(m)),
        sin_m=float(math.sin(m)),
        threshold=float(math.cos(math.pi - m)),
        mm=float(math.sin(m) * m),
        tn=tn,
    )

    # --- Generation-aware VMEM budget. ---
    vmem_est = (2 * E_pad * tn * itemsize        # weight tile (double-buffered)
                + 2 * tn * 4                     # inv_col tile
                + 2 * tm * E_pad * itemsize      # embedding tile
                + 2 * tm * 128 * 4               # labels (layout-padded)
                + 2 * tm * tn * out_isize        # output tile
                + (8 << 20))                     # headroom
    vmem_cap = (48 << 20) if is_v7 else (100 << 20)
    vmem_limit = int(min(max(vmem_est, 32 << 20), vmem_cap))

    # Grid: class tiles outer, row tiles inner -> the weight block index
    # (which depends only on j) is constant across inner row steps and is
    # not re-DMA'd.
    grid = (C_pad // tn, B_pad // tm)

    out = pl.pallas_call(
        kernel,
        out_shape=jax.ShapeDtypeStruct((B_pad, C_pad), out_dtype),
        grid_spec=pltpu.PrefetchScalarGridSpec(
            num_scalar_prefetch=0,
            grid=grid,
            in_specs=[
                pl.BlockSpec((tm, E_pad), lambda j, i: (i, 0)),   # embeddings
                pl.BlockSpec((E_pad, tn), lambda j, i: (0, j)),   # weight tile
                pl.BlockSpec((1, tn), lambda j, i: (0, j)),       # 1/||w_col||
                pl.BlockSpec((tm, 1), lambda j, i: (i, 0)),       # labels
            ],
            out_specs=pl.BlockSpec((tm, tn), lambda j, i: (i, j)),
        ),
        compiler_params=pltpu.CompilerParams(
            dimension_semantics=("parallel", "parallel"),
            vmem_limit_bytes=vmem_limit,
        ),
    )(emb, w, inv_col, lab2d)

    if B_pad != B or C_pad != C:
        out = out[:B, :C]
    return out


def _init_arcface_weight(key, embedding_size, class_num):
    # Mirrors: Tensor(E, C).uniform_(-1, 1).renorm_(2, 1, 1e-5).mul_(1e5)
    w = jax.random.uniform(key, (embedding_size, class_num),
                           dtype=jnp.float32, minval=-1.0, maxval=1.0)
    col_norm = jnp.sqrt(jnp.sum(w * w, axis=0, keepdims=True))
    scale = jnp.where(col_norm > 1e-5, 1e-5 / col_norm, 1.0)
    return w * scale * 1e5


def _reference_forward(embeddings, weight, label, s=64.0, m=0.5,
                       compute_dtype=jnp.float32):
    """Pure-JAX reference of the PyTorch module's forward.

    With compute_dtype=bfloat16 the matmul operands are cast exactly like the
    kernel's fast path (bf16 operands, f32 accumulation, f32 column norms),
    so both precisions can be validated tightly.
    """
    cos_m, sin_m = math.cos(m), math.sin(m)
    mm = sin_m * m
    threshold = math.cos(math.pi - m)

    emb = embeddings.astype(compute_dtype)
    w = weight.astype(compute_dtype)
    wf = weight.astype(jnp.float32)
    inv = jax.lax.rsqrt(jnp.sum(wf * wf, axis=0, keepdims=True))
    raw = jnp.dot(emb, w, preferred_element_type=jnp.float32)
    cos_theta = jnp.clip(raw * inv, -1.0, 1.0)
    sin_theta = jnp.sqrt(jnp.maximum(1.0 - cos_theta ** 2, 0.0))
    cos_theta_m = cos_theta * cos_m - sin_theta * sin_m
    cos_theta_m = jnp.where(cos_theta <= threshold, cos_theta - mm, cos_theta_m)
    B = embeddings.shape[0]
    rows = jnp.arange(B)
    out = cos_theta.at[rows, label].set(cos_theta_m[rows, label])
    return out * s


if __name__ == "__main__":
    # Small shapes consistent with the module's forward:
    # embeddings [B, E], kernel [E, C], label [B].
    B, E, C = 8, 32, 256
    s_scale, margin = 64.0, 0.5

    key = jax.random.PRNGKey(0)
    k_emb, k_w, k_lab = jax.random.split(key, 3)

    embeddings = jax.random.normal(k_emb, (B, E), dtype=jnp.float32)
    weight = _init_arcface_weight(k_w, E, C)
    label = jax.random.randint(k_lab, (B,), 0, C, dtype=jnp.int32)

    # Fast path: bf16-streamed operands, f32 accumulation + margin math.
    out_bf16 = jax.block_until_ready(
        arcface_forward(embeddings, weight, label, s=s_scale, m=margin))

    # Full-f32 path, checked tightly against the f32 reference.
    out_f32 = jax.block_until_ready(
        arcface_forward(embeddings, weight, label, s=s_scale, m=margin,
                        compute_dtype=jnp.float32))

    # bf16-output path (halves logits writeback), checked loosely.
    out_bf16_out = jax.block_until_ready(
        arcface_forward(embeddings, weight, label, s=s_scale, m=margin,
                        out_dtype=jnp.bfloat16))

    ref_f32 = _reference_forward(embeddings, weight, label, s=s_scale, m=margin)
    ref_bf16 = _reference_forward(embeddings, weight, label, s=s_scale,
                                  m=margin, compute_dtype=jnp.bfloat16)

    assert out_f32.shape == (B, C) and out_bf16.shape == (B, C)
    assert out_bf16_out.shape == (B, C)
    assert jnp.allclose(out_f32, ref_f32, atol=2e-2, rtol=2e-3), "f32 mismatch"
    assert jnp.allclose(out_bf16, ref_bf16, atol=5e-2, rtol=5e-3), "bf16 mismatch"
    assert jnp.allclose(out_bf16_out.astype(jnp.float32), ref_bf16,
                        atol=0.75, rtol=2e-2), "bf16-output mismatch"

    print("KERNEL_OK")
</pallas_src>

<mosaic_0001>
module attributes {stable_mosaic.version = 11 : i64} {
  func.func @_arcface_kernel(%arg0: i32, %arg1: i32, %arg2: memref<8x128xbf16, #tpu.memory_space<vmem>>, %arg3: memref<128x256xbf16, #tpu.memory_space<vmem>>, %arg4: memref<1x256xf32, #tpu.memory_space<vmem>>, %arg5: memref<8x1xi32, #tpu.memory_space<vmem>>, %arg6: memref<8x256xf32, #tpu.memory_space<vmem>>) attributes {dimension_semantics = [#tpu.dimension_semantics<parallel>, #tpu.dimension_semantics<parallel>], iteration_bounds = array<i64: 1, 1>, scalar_prefetch = 0 : i64, scratch_operands = 0 : i64, tpu.core_type = #tpu.core_type<tc>, window_params = [{transform_indices = @transform_0, window_bounds = array<i64: 8, 128>}, {transform_indices = @transform_1, window_bounds = array<i64: 128, 256>}, {transform_indices = @transform_2, window_bounds = array<i64: 1, 256>}, {transform_indices = @transform_3, window_bounds = array<i64: 8, 1>}, {transform_indices = @transform_4, window_bounds = array<i64: 8, 256>}]} {
    %c0 = arith.constant 0 : index
    %c0_0 = arith.constant 0 : index
    %0 = vector.load %arg2[%c0, %c0_0] : memref<8x128xbf16, #tpu.memory_space<vmem>>, vector<8x128xbf16>
    %c0_1 = arith.constant 0 : index
    %c0_2 = arith.constant 0 : index
    %1 = vector.load %arg3[%c0_1, %c0_2] : memref<128x256xbf16, #tpu.memory_space<vmem>>, vector<128x256xbf16>
    %c0_3 = arith.constant 0 : index
    %c0_4 = arith.constant 0 : index
    %2 = vector.load %arg4[%c0_3, %c0_4] : memref<1x256xf32, #tpu.memory_space<vmem>>, vector<1x256xf32>
    %c0_5 = arith.constant 0 : index
    %c0_6 = arith.constant 0 : index
    %3 = vector.load %arg5[%c0_5, %c0_6] : memref<8x1xi32, #tpu.memory_space<vmem>>, vector<8x1xi32>
    %cst = arith.constant dense<0.000000e+00> : vector<8x256xf32>
    %4 = tpu.matmul %0, %1, %cst {dimension_numbers = #tpu.dot_dimension_numbers<[1], [0], [0], [1], [0, 0, 1, 1], [], []>} : vector<8x128xbf16>, vector<128x256xbf16>, vector<8x256xf32> -> vector<8x256xf32>
    %5 = vector.broadcast %2 : vector<1x256xf32> to vector<8x256xf32>
    %6 = arith.mulf %4, %5 : vector<8x256xf32>
    %cst_7 = arith.constant -1.000000e+00 : f32
    %cst_8 = arith.constant 1.000000e+00 : f32
    %7 = vector.broadcast %cst_7 : f32 to vector<8x256xf32>
    %8 = arith.maximumf %7, %6 : vector<8x256xf32>
    %9 = vector.broadcast %cst_8 : f32 to vector<8x256xf32>
    %10 = arith.minimumf %9, %8 : vector<8x256xf32>
    %c256_i32 = arith.constant 256 : i32
    %11 = arith.muli %arg0, %c256_i32 : i32
    %12 = tpu.iota {dimensions = array<i32: 1>} : vector<8x256xi32>
    %13 = vector.broadcast %11 : i32 to vector<8x256xi32>
    %14 = arith.addi %13, %12 : vector<8x256xi32>
    %15 = vector.broadcast %3 : vector<8x1xi32> to vector<8x256xi32>
    %16 = arith.cmpi eq, %14, %15 : vector<8x256xi32>
    %cst_9 = arith.constant 0.000000e+00 : f32
    %17 = vector.broadcast %cst_9 : f32 to vector<8x256xf32>
    %18 = arith.select %16, %10, %17 : vector<8x256xi1>, vector<8x256xf32>
    %cst_10 = arith.constant dense<0.000000e+00> : vector<8xf32>
    %19 = vector.multi_reduction <add>, %18, %cst_10 [1] : vector<8x256xf32> to vector<8xf32>
    %20 = vector.shape_cast %19 : vector<8xf32> to vector<8x1xf32>
    %21 = arith.mulf %20, %20 : vector<8x1xf32>
    %cst_11 = arith.constant 1.000000e+00 : f32
    %22 = vector.broadcast %cst_11 : f32 to vector<8x1xf32>
    %23 = arith.subf %22, %21 : vector<8x1xf32>
    %cst_12 = arith.constant 0.000000e+00 : f32
    %24 = vector.broadcast %cst_12 : f32 to vector<8x1xf32>
    %25 = arith.maximumf %23, %24 : vector<8x1xf32>
    %26 = math.sqrt %25 : vector<8x1xf32>
    %cst_13 = arith.constant 0.87758255 : f32
    %27 = vector.broadcast %cst_13 : f32 to vector<8x1xf32>
    %28 = arith.mulf %20, %27 : vector<8x1xf32>
    %cst_14 = arith.constant 0.47942555 : f32
    %29 = vector.broadcast %cst_14 : f32 to vector<8x1xf32>
    %30 = arith.mulf %26, %29 : vector<8x1xf32>
    %31 = arith.subf %28, %30 : vector<8x1xf32>
    %cst_15 = arith.constant -0.87758255 : f32
    %32 = vector.broadcast %cst_15 : f32 to vector<8x1xf32>
    %33 = arith.cmpf ole, %20, %32 : vector<8x1xf32>
    %cst_16 = arith.constant 0.239712775 : f32
    %34 = vector.broadcast %cst_16 : f32 to vector<8x1xf32>
    %35 = arith.subf %20, %34 : vector<8x1xf32>
    %36 = arith.select %33, %35, %31 : vector<8x1xi1>, vector<8x1xf32>
    %37 = vector.shape_cast %36 : vector<8x1xf32> to vector<8x1xf32>
    %38 = vector.broadcast %37 : vector<8x1xf32> to vector<8x256xf32>
    %39 = arith.select %16, %38, %10 : vector<8x256xi1>, vector<8x256xf32>
    %cst_17 = arith.constant 6.400000e+01 : f32
    %40 = vector.broadcast %cst_17 : f32 to vector<8x256xf32>
    %41 = arith.mulf %39, %40 : vector<8x256xf32>
    %c0_18 = arith.constant 0 : index
    %c0_19 = arith.constant 0 : index
    %42 = vector.load %arg6[%c0_18, %c0_19] : memref<8x256xf32, #tpu.memory_space<vmem>>, vector<8x256xf32>
    tpu.vector_store %arg6[%c0_18, %c0_19], %41 {strides = array<i32>} : memref<8x256xf32, #tpu.memory_space<vmem>>, vector<8x256xf32>,
    return
  }
  func.func @transform_0(%arg0: i32, %arg1: i32) -> (i32, i32) {
    %c0_i32 = arith.constant 0 : i32
    %c0_i32_0 = arith.constant 0 : i32
    return %arg1, %c0_i32 : i32, i32
  }
  func.func @transform_1(%arg0: i32, %arg1: i32) -> (i32, i32) {
    %c0_i32 = arith.constant 0 : i32
    %c0_i32_0 = arith.constant 0 : i32
    return %c0_i32, %arg0 : i32, i32
  }
  func.func @transform_2(%arg0: i32, %arg1: i32) -> (i32, i32) {
    %c0_i32 = arith.constant 0 : i32
    %c0_i32_0 = arith.constant 0 : i32
    return %c0_i32, %arg0 : i32, i32
  }
  func.func @transform_3(%arg0: i32, %arg1: i32) -> (i32, i32) {
    %c0_i32 = arith.constant 0 : i32
    %c0_i32_0 = arith.constant 0 : i32
    return %arg1, %c0_i32 : i32, i32
  }
  func.func @transform_4(%arg0: i32, %arg1: i32) -> (i32, i32) {
    %c0_i32 = arith.constant 0 : i32
    return %arg1, %arg0 : i32, i32
  }
}

</mosaic_0001>

<llo_original>
// kernel: tpu_custom_call.1
$region0: #{tpu_custom_call.1}
  #allocation0 [shape = 'u32[]', space=smem, size = 0x4, offset = 0x4, fixed_abs, tag = 'smem constant byte address 0x4 - core index']
  #allocation1 [shape = 'u32[72,128]{1,0:T(1,128)}', space=vmem, size = 0x9000, scoped, tag = 'internal scratch']
  %s0 = inlined_call_operand.vmem [shape: bf16[8,128], index: 0, kind: input, shape index: {}]
  %s1 = inlined_call_operand.hbm [shape: bf16[128,256], index: 1, kind: input, shape index: {}]
  %s2 = inlined_call_operand.vmem [shape: f32[1,256], index: 2, kind: input, shape index: {}]
  %s3 = inlined_call_operand.vmem [shape: s32[8,1], index: 3, kind: input, shape index: {}]
  %s4 = inlined_call_operand.hbm [shape: f32[8,256], index: 4, kind: output, shape index: {}]
  %s5 = sld [smem:[#allocation0]]
  $region30: #{tpu_custom_call.1} parent=0
    _
  %s7 = ssub.s32 1, %s5
  %s8 = scalar_select 0, %s7, %s5
  $region1: #{tpu_custom_call.1} parent=0
    #allocation2 [shape = 'u8[65536]{0}', space=vmem, size = 0x10000, scoped, tag = 'input window, operand 1, single buffered']
    #allocation3 [shape = 's32[1]{0}', space=sflag, size = 0x4, scoped, tag = 'scoped memory for tpu_custom_call.1']
    #allocation4 [shape = 's32[1]{0}', space=sflag, size = 0x4, scoped, tag = 'scoped memory for tpu_custom_call.1']
    #allocation5 [shape = 'u8[8192]{0}', space=vmem, size = 0x2000, scoped, tag = 'output window, operand 0, single buffered']
    %9 = vsyncpa [#allocation3], 0
    %10 = vsyncpa [#allocation4], 0
    // Predicated region
    $region2: #{tpu_custom_call.1} parent=1 // pred_check
      _
    $region3: #{tpu_custom_call.1} parent=1 // pred_check_branch
      %12 = sbr.rel (0) target = $region5
    $region4: #{tpu_custom_call.1} parent=1 // pred_region
      _
    $region5: #{tpu_custom_call.1} parent=1 // pred_fallthru
      _
    // Predicated region
    $region6: #{tpu_custom_call.1} parent=1 // pred_check
      _
    $region7: #{tpu_custom_call.1} parent=1 // pred_check_branch
      %14 = sbr.rel (0) target = $region9
    $region8: #{tpu_custom_call.1} parent=1 // pred_region
      %16 = vsyncadd [#allocation3], 0
      %s17 = sshll.u32 %s1, 4
      %s18 = int_to_ptr.hbm [resolvable:$true] %s17
      %s19 = sshll.u32 [#allocation2], 4
      %s20 = int_to_ptr.vmem [resolvable:$true] %s19
      %25 = dma.hbm_to_vmem [thread:$0]  %s18, 2048, %s20, [#allocation3], 128, 128, 8
    $region9: #{tpu_custom_call.1} parent=1 // pred_fallthru
      _
    // Predicated region
    $region10: #{tpu_custom_call.1} parent=1 // pred_check
      _
    $region11: #{tpu_custom_call.1} parent=1 // pred_check_branch
      %27 = sbr.rel (0) target = $region13
    $region12: #{tpu_custom_call.1} parent=1 // pred_region
      _
    $region13: #{tpu_custom_call.1} parent=1 // pred_fallthru
      _
    // Predicated region
    $region14: #{tpu_custom_call.1} parent=1 // pred_check
      _
    $region15: #{tpu_custom_call.1} parent=1 // pred_check_branch
      %29 = sbr.rel (0) target = $region17
    $region16: #{tpu_custom_call.1} parent=1 // pred_region
      _
    $region17: #{tpu_custom_call.1} parent=1 // pred_fallthru
      _
    // Predicated region
    $region18: #{tpu_custom_call.1} parent=1 // pred_check
      _
    $region19: #{tpu_custom_call.1} parent=1 // pred_check_branch
      %31 = sbr.rel (0) target = $region21
    $region20: #{tpu_custom_call.1} parent=1 // pred_region
      %33 = dma.done [#allocation3], 2048
    $region21: #{tpu_custom_call.1} parent=1 // pred_fallthru
      _
    %v34 = vld [vmem:[%s0] sm:$0xf]
    %v35 = vld [vmem:[#allocation2] sm:$0xff]
    %v36 = vld [vmem:[#allocation2 + $0x8] sm:$0xff]
    %v37 = vld [vmem:[#allocation2 + $0x10] sm:$0xff]
    %v38 = vld [vmem:[#allocation2 + $0x18] sm:$0xff]
    %v39 = vld [vmem:[#allocation2 + $0x20] sm:$0xff]
    %v40 = vld [vmem:[#allocation2 + $0x28] sm:$0xff]
    %v41 = vld [vmem:[#allocation2 + $0x30] sm:$0xff]
    %v42 = vld [vmem:[#allocation2 + $0x38] sm:$0xff]
    %v43 = vld [vmem:[#allocation2 + $0x40] sm:$0xff]
    %v44 = vld [vmem:[#allocation2 + $0x48] sm:$0xff]
    %v45 = vld [vmem:[#allocation2 + $0x50] sm:$0xff]
    %v46 = vld [vmem:[#allocation2 + $0x58] sm:$0xff]
    %v47 = vld [vmem:[#allocation2 + $0x60] sm:$0xff]
    %v48 = vld [vmem:[#allocation2 + $0x68] sm:$0xff]
    %v49 = vld [vmem:[#allocation2 + $0x70] sm:$0xff]
    %v50 = vld [vmem:[#allocation2 + $0x78] sm:$0xff]
    %v51 = vld [vmem:[%s2] sm:$0x3]
    %v52 = vld [vmem:[%s3] sm:$0xff]
    %v69 = vunpack.c.l.b16 %v35
    %v70 = vunpack.c.h.b16 %v35
    %v71 = vunpack.c.l.b16 %v36
    %v72 = vunpack.c.h.b16 %v36
    %v73 = vunpack.c.l.b16 %v37
    %v74 = vunpack.c.h.b16 %v37
    %v75 = vunpack.c.l.b16 %v38
    %v76 = vunpack.c.h.b16 %v38
    %v77 = vunpack.c.l.b16 %v39
    %v78 = vunpack.c.h.b16 %v39
    %v79 = vunpack.c.l.b16 %v40
    %v80 = vunpack.c.h.b16 %v40
    %v81 = vunpack.c.l.b16 %v41
    %v82 = vunpack.c.h.b16 %v41
    %v83 = vunpack.c.l.b16 %v42
    %v84 = vunpack.c.h.b16 %v42
    %v85 = vunpack.c.l.b16 %v43
    %v86 = vunpack.c.h.b16 %v43
    %v87 = vunpack.c.l.b16 %v44
    %v88 = vunpack.c.h.b16 %v44
    %v89 = vunpack.c.l.b16 %v45
    %v90 = vunpack.c.h.b16 %v45
    %v91 = vunpack.c.l.b16 %v46
    %v92 = vunpack.c.h.b16 %v46
    %v93 = vunpack.c.l.b16 %v47
    %v94 = vunpack.c.h.b16 %v47
    %v95 = vunpack.c.l.b16 %v48
    %v96 = vunpack.c.h.b16 %v48
    %v97 = vunpack.c.l.b16 %v49
    %v98 = vunpack.c.h.b16 %v49
    %v99 = vunpack.c.l.b16 %v50
    %v100 = vunpack.c.h.b16 %v50
    %v101 = vpack.c.b16 %v71, %v69
    %v102 = vpack.c.b16 %v72, %v70
    %v103 = vpack.c.b16 %v75, %v73
    %v104 = vpack.c.b16 %v76, %v74
    %v105 = vpack.c.b16 %v79, %v77
    %v106 = vpack.c.b16 %v80, %v78
    %v107 = vpack.c.b16 %v83, %v81
    %v108 = vpack.c.b16 %v84, %v82
    %v109 = vpack.c.b16 %v87, %v85
    %v110 = vpack.c.b16 %v88, %v86
    %v111 = vpack.c.b16 %v91, %v89
    %v112 = vpack.c.b16 %v92, %v90
    %v113 = vpack.c.b16 %v95, %v93
    %v114 = vpack.c.b16 %v96, %v94
    %v115 = vpack.c.b16 %v99, %v97
    %v116 = vpack.c.b16 %v100, %v98
    %133 = vmatpush.bf16.msra.mxu0 %v115
    %134 = vmatpush.bf16.msra.mxu0 %v113
    %135 = vmatpush.bf16.msra.mxu0 %v111
    %136 = vmatpush.bf16.msra.mxu0 %v109
    %137 = vmatpush.bf16.msra.mxu0 %v107
    %138 = vmatpush.bf16.msra.mxu0 %v105
    %139 = vmatpush.bf16.msra.mxu0 %v103
    %140 = vmatpush.bf16.msra.mxu0 %v101
    %141 = vmatmul.bf16.gmra.mxu0 %v34
    %v142 = vpop.f32.mrf.mxu0
    %v143 = vadd.f32 0.0, %v142
    %v144 = vpop.f32.mrf.mxu0
    %145 = vdwg.mxu0
    %146 = vmatpush.bf16.msra.mxu0 %v116
    %147 = vmatpush.bf16.msra.mxu0 %v114
    %148 = vmatpush.bf16.msra.mxu0 %v112
    %149 = vmatpush.bf16.msra.mxu0 %v110
    %150 = vmatpush.bf16.msra.mxu0 %v108
    %151 = vmatpush.bf16.msra.mxu0 %v106
    %152 = vmatpush.bf16.msra.mxu0 %v104
    %153 = vmatpush.bf16.msra.mxu0 %v102
    %154 = vmatmul.bf16.gmra.mxu0 %v34
    %v155 = vpop.f32.mrf.mxu0
    %v156 = vadd.f32 0.0, %v155
    %v157 = vpop.f32.mrf.mxu0
    %158 = vdwg.mxu0
    %v160 = vperm.slane %v51, 0
    %v161 = vperm.slane %v51, 1
    %v164 = vmul.f32 %v143, %v160
    %v165 = vmul.f32 %v156, %v161
    %v166 = vmax.f32 %v164, -1.0
    %v167 = vmax.f32 %v165, -1.0
    %v168 = vmin.f32 %v166, 1.0
    %v169 = vmin.f32 %v167, 1.0
    %s170 = smul.u32 0, 256
    %v171 = vlaneseq
    %v172 = vand.u32 %v171, 127
    %v173 = vadd.s32 %v172, 128
    %v174 = vstv %s170
    %v175 = vadd.s32 %v174, %v172
    %v176 = vadd.s32 %v174, %v173
    %177 = vset.pattern.permute.xlu0 0
    %178 = vperm.xlu0 %177, %v52
    %v179 = vpop.permute.xlu0 %178
    %vm180 = vcmp.eq.s32.totalorder %v175, %v179
    %vm181 = vcmp.eq.s32.totalorder %v176, %v179
    %v182 = vsel %vm180, %v168, 0.0
    %v183 = vsel %vm181, %v169, 0.0
    %v184 = vadd.f32 %v182, %v183
    %185 = vadd.xlane.f32.xlu0 %v184
    %v186 = vpop.xlane.xlu0 %185
    %v187 = vmul.f32 %v186, %v186
    %v188 = vsub.f32 1.0, %v187
    %v189 = vmax.f32 %v188, 0.0
    %v190 = vrsqrt.pop %v189
    %v191 = vmul.f32 %v190, %v189
    %v192 = vmul.f32 %v191, %v190
    %v193 = vmul.f32 0.5, %v192
    %v194 = vsub.f32 1.5, %v193
    %v195 = vmul.f32 %v190, %v194
    %v196 = vmul.f32 %v189, %v195
    %vm197 = vcmp.eq.f32.partialorder %v189, inf
    %v198 = vsel %vm197, %v189, %v196
    %vm199 = vcmp.eq.f32.partialorder %v189, 0.0
    %v200 = vand.u32 %v189, 2147483648
    %v201 = vsel %vm199, %v200, %v198
    %v202 = vmul.f32 %v186, 0.87758255
    %v203 = vmul.f32 %v201, 0.47942555
    %v204 = vsub.f32 %v202, %v203
    %vm205 = vcmp.le.f32.partialorder %v186, -0.87758255
    %v206 = vsub.f32 %v186, 0.23971277
    %v207 = vsel %vm205, %v206, %v204
    %v208 = vsel %vm180, %v207, %v168
    %v209 = vsel %vm181, %v207, %v169
    %v210 = vmul.f32 %v208, 64.0
    %v211 = vmul.f32 %v209, 64.0
    %212 = vst [vmem:[#allocation5] sm:$0xff] %v210
    %213 = vst [vmem:[#allocation5 + $0x8] sm:$0xff] %v211
    // Predicated region
    $region22: #{tpu_custom_call.1} parent=1 // pred_check
      _
    $region23: #{tpu_custom_call.1} parent=1 // pred_check_branch
      %215 = sbr.rel (0) target = $region25
    $region24: #{tpu_custom_call.1} parent=1 // pred_region
      %217 = vsyncadd [#allocation4], 0
      %s219 = sshll.u32 [#allocation5], 4
      %s220 = int_to_ptr.vmem [resolvable:$true] %s219
      %s221 = sshll.u32 %s4, 4
      %s222 = int_to_ptr.hbm [resolvable:$true] %s221
      %224 = dma.vmem_to_hbm [thread:$0]  %s220, 256, %s222, [#allocation4]
    $region25: #{tpu_custom_call.1} parent=1 // pred_fallthru
      _
    // Predicated region
    $region26: #{tpu_custom_call.1} parent=1 // pred_check
      _
    $region27: #{tpu_custom_call.1} parent=1 // pred_check_branch
      %226 = sbr.rel (0) target = $region29
    $region28: #{tpu_custom_call.1} parent=1 // pred_region
      %228 = dma.done [#allocation4], 256
    $region29: #{tpu_custom_call.1} parent=1 // pred_fallthru
      _
    %229 = vsyncpa [#allocation3], 1
    %230 = vsyncpa [#allocation4], 1

</llo_original>
